<compile_context>
chip_gen: v6e
topology: v6e:2x2x1
jax: 0.10.0
libtpu: 0.0.40
codegen_flags: <defaults>
</compile_context>

<pallas_src>
import jax
import jax.numpy as jnp
from jax.experimental import pallas as pl
from jax.experimental.pallas import tpu as pltpu

# ---------------- config (small, consistent with the module) ----------------
N_UNITS = 32       # NU
N_LAYERS = 3       # NL
IN_CH = 3
OUT_CH = 4
LATENT_SIZE = 16
B = 2              # number of latents
N = 128            # number of coordinate points per latent

PAD_IN = 8         # coordinate channels padded 3 -> 8 (sublane multiple)
PAD_OUT = 8        # output channels padded 4 -> 8 (sublane multiple)


# ------------------------------ Pallas kernel -------------------------------
def weights_field_kernel(x_ref, w0_ref, w12_ref, w3_ref,
                         b0_ref, b12_ref, b3_ref, o_ref):
    # x_ref:   (PAD_IN, BN)   coords, channel-padded, batch folded into lanes
    # w0_ref:  (NU, PAD_IN)   linear_x weight as (Cout, Cin_pad)
    # w12_ref: (2, NU, NU)    hidden-layer weights as (Cout, Cin)
    # w3_ref:  (PAD_OUT, NU)  output weight, Cout padded 4 -> 8
    # b0_ref:  (NU, BN)       per-batch latent conditioning c, lane-broadcast
    # b12_ref: (2, NU, BN)    hidden-layer biases, lane-broadcast
    # b3_ref:  (PAD_OUT, BN)  output bias (padded rows zero), lane-broadcast
    # o_ref:   (PAD_OUT, BN)  lane-dense output slab
    f32 = jnp.float32
    h = jnp.maximum(
        jnp.dot(w0_ref[...], x_ref[...], preferred_element_type=f32) + b0_ref[...],
        0.0)
    h = jnp.maximum(
        jnp.dot(w12_ref[0], h, preferred_element_type=f32) + b12_ref[0], 0.0)
    h = jnp.maximum(
        jnp.dot(w12_ref[1], h, preferred_element_type=f32) + b12_ref[1], 0.0)
    o_ref[...] = (jnp.dot(w3_ref[...], h, preferred_element_type=f32)
                  + b3_ref[...]).astype(o_ref.dtype)


# --------------------- one-time (static) parameter packing -------------------
def pack_static_params(params, batch, n_points):
    """Everything that does not depend on (x, latent): done once, not per call."""
    (wx, bx, wz, bz, w1, b1, w2, b2, wo, bo) = params
    NU = w1.shape[0]
    in_ch = wx.shape[0]
    out_ch = wo.shape[1]
    BN = batch * n_points

    w0p = jnp.pad(wx.T, ((0, 0), (0, PAD_IN - in_ch)))               # (NU, PAD_IN)
    w12p = jnp.stack([w1.T, w2.T])                                    # (2, NU, NU)
    w3p = jnp.pad(wo.T, ((0, PAD_OUT - out_ch), (0, 0)))              # (PAD_OUT, NU)

    b12p = jnp.broadcast_to(
        jnp.stack([b1[0], b2[0]])[:, :, None], (2, NU, BN))           # (2, NU, BN)
    bo_pad = jnp.zeros((PAD_OUT,), wo.dtype).at[:out_ch].set(bo[0])
    b3p = jnp.broadcast_to(bo_pad[:, None], (PAD_OUT, BN))            # (PAD_OUT, BN)

    bzx = (bz + bx)[0]                                                # (NU,)
    return dict(wz=wz, bzx=bzx, w0p=w0p, w12p=w12p, w3p=w3p,
                b12p=b12p, b3p=b3p)


# ------------------------------ per-call wrapper ------------------------------
def weights_field_forward(x, latent, packed):
    """x: (B, N, in_ch), latent: (B, latent_size) -> (B, N, out_ch)."""
    Bn, Nn, in_ch = x.shape
    BN = Bn * Nn
    NU = packed["w12p"].shape[1]

    # Per-batch conditioning: latent path + linear_x bias, repeated across the
    # batch's 128-lane segment of the folded lane axis.
    c = latent @ packed["wz"] + packed["bzx"]                         # (B, NU)
    b0 = jnp.broadcast_to(c.T[:, :, None], (NU, Bn, Nn)).reshape(NU, BN)

    # Coordinates: (B, N, in_ch) -> (in_ch, B*N), channel-padded to PAD_IN rows.
    xt = jnp.transpose(x, (2, 0, 1)).reshape(in_ch, BN)
    x_pack = jnp.pad(xt, ((0, PAD_IN - in_ch), (0, 0)))               # (PAD_IN, BN)

    vmem = pl.BlockSpec(memory_space=pltpu.MemorySpace.VMEM)
    out_full = pl.pallas_call(
        weights_field_kernel,
        out_shape=jax.ShapeDtypeStruct((PAD_OUT, BN), jnp.float32),
        in_specs=[vmem, vmem, vmem, vmem, vmem, vmem, vmem],
        out_specs=vmem,
    )(x_pack, packed["w0p"], packed["w12p"], packed["w3p"],
      b0, packed["b12p"], packed["b3p"])

    # Slice off padded output rows; return channels-last (B, N, out_ch).
    return jnp.transpose(out_full[:OUT_CH].reshape(OUT_CH, Bn, Nn), (1, 2, 0))


# ---------------------------- parameter creation -----------------------------
def make_params(key):
    """Deterministic, kaiming-ish scaled weights. Weights stored as (in, out)."""
    ks = jax.random.split(key, 10)

    def lin(kw, fan_in, fan_out):
        scale = jnp.sqrt(2.0 / fan_in)
        w = jax.random.normal(kw, (fan_in, fan_out), jnp.float32) * scale
        b = jnp.zeros((1, fan_out), jnp.float32)
        return w, b

    wx, bx = lin(ks[0], IN_CH, N_UNITS)        # linear_x
    wz, bz = lin(ks[1], LATENT_SIZE, N_UNITS)  # linear_z
    # mlp = create_mlp(NU, out_ch, NU, NL-1): 2 hidden layers + final linear
    w1, b1 = lin(ks[2], N_UNITS, N_UNITS)
    w2, b2 = lin(ks[3], N_UNITS, N_UNITS)
    wo, bo = lin(ks[4], N_UNITS, OUT_CH)
    # nonzero deterministic biases so broadcasting is exercised
    bx = bx + 0.01 * jax.random.normal(ks[5], bx.shape, jnp.float32)
    bz = bz + 0.01 * jax.random.normal(ks[6], bz.shape, jnp.float32)
    b1 = b1 + 0.01 * jax.random.normal(ks[7], b1.shape, jnp.float32)
    b2 = b2 + 0.01 * jax.random.normal(ks[8], b2.shape, jnp.float32)
    bo = bo + 0.01 * jax.random.normal(ks[9], bo.shape, jnp.float32)
    return (wx, bx, wz, bz, w1, b1, w2, b2, wo, bo)


def reference_forward(x, latent, params):
    (wx, bx, wz, bz, w1, b1, w2, b2, wo, bo) = params
    h = jax.nn.relu(x @ wx + bx + (latent @ wz + bz)[:, None, :])
    h = jax.nn.relu(h @ w1 + b1)
    h = jax.nn.relu(h @ w2 + b2)
    return h @ wo + bo


if __name__ == "__main__":
    key = jax.random.PRNGKey(0)
    kx, kz, kp = jax.random.split(key, 3)

    x = jax.random.normal(kx, (B, N, IN_CH), jnp.float32)       # coordinates
    latent = jax.random.normal(kz, (B, LATENT_SIZE), jnp.float32)
    params = make_params(kp)

    # One-time static packing, hoisted out of the per-call jitted forward.
    packed = pack_static_params(params, B, N)

    fwd = jax.jit(weights_field_forward)
    out = jax.block_until_ready(fwd(x, latent, packed))

    ref = reference_forward(x, latent, params)
    assert out.shape == (B, N, OUT_CH)
    assert jnp.allclose(out, ref, atol=1e-4, rtol=1e-4)

    print("KERNEL_OK")
</pallas_src>

<mosaic_0001>
module attributes {stable_mosaic.version = 11 : i64} {
  func.func @weights_field_kernel(%arg0: memref<8x256xf32, #tpu.memory_space<vmem>>, %arg1: memref<32x8xf32, #tpu.memory_space<vmem>>, %arg2: memref<2x32x32xf32, #tpu.memory_space<vmem>>, %arg3: memref<8x32xf32, #tpu.memory_space<vmem>>, %arg4: memref<32x256xf32, #tpu.memory_space<vmem>>, %arg5: memref<2x32x256xf32, #tpu.memory_space<vmem>>, %arg6: memref<8x256xf32, #tpu.memory_space<vmem>>, %arg7: memref<8x256xf32, #tpu.memory_space<vmem>>) attributes {dimension_semantics = [], scalar_prefetch = 0 : i64, scratch_operands = 0 : i64, tpu.core_type = #tpu.core_type<tc>} {
    %c0 = arith.constant 0 : index
    %c0_0 = arith.constant 0 : index
    %0 = vector.load %arg1[%c0, %c0_0] : memref<32x8xf32, #tpu.memory_space<vmem>>, vector<32x8xf32>
    %c0_1 = arith.constant 0 : index
    %c0_2 = arith.constant 0 : index
    %1 = vector.load %arg0[%c0_1, %c0_2] : memref<8x256xf32, #tpu.memory_space<vmem>>, vector<8x256xf32>
    %cst = arith.constant dense<0.000000e+00> : vector<32x256xf32>
    %2 = tpu.matmul %0, %1, %cst {dimension_numbers = #tpu.dot_dimension_numbers<[1], [0], [0], [1], [0, 0, 1, 1], [], []>} : vector<32x8xf32>, vector<8x256xf32>, vector<32x256xf32> -> vector<32x256xf32>
    %c0_3 = arith.constant 0 : index
    %c0_4 = arith.constant 0 : index
    %3 = vector.load %arg4[%c0_3, %c0_4] : memref<32x256xf32, #tpu.memory_space<vmem>>, vector<32x256xf32>
    %4 = arith.addf %2, %3 : vector<32x256xf32>
    %cst_5 = arith.constant 0.000000e+00 : f32
    %5 = vector.broadcast %cst_5 : f32 to vector<32x256xf32>
    %6 = arith.maximumf %4, %5 : vector<32x256xf32>
    %c0_6 = arith.constant 0 : index
    %c0_7 = arith.constant 0 : index
    %c0_8 = arith.constant 0 : index
    %7 = vector.load %arg2[%c0_6, %c0_7, %c0_8] : memref<2x32x32xf32, #tpu.memory_space<vmem>>, vector<1x32x32xf32>
    %8 = vector.shape_cast %7 : vector<1x32x32xf32> to vector<32x32xf32>
    %cst_9 = arith.constant dense<0.000000e+00> : vector<32x256xf32>
    %9 = tpu.matmul %8, %6, %cst_9 {dimension_numbers = #tpu.dot_dimension_numbers<[1], [0], [0], [1], [0, 0, 1, 1], [], []>} : vector<32x32xf32>, vector<32x256xf32>, vector<32x256xf32> -> vector<32x256xf32>
    %c0_10 = arith.constant 0 : index
    %c0_11 = arith.constant 0 : index
    %c0_12 = arith.constant 0 : index
    %10 = vector.load %arg5[%c0_10, %c0_11, %c0_12] : memref<2x32x256xf32, #tpu.memory_space<vmem>>, vector<1x32x256xf32>
    %11 = vector.shape_cast %10 : vector<1x32x256xf32> to vector<32x256xf32>
    %12 = arith.addf %9, %11 : vector<32x256xf32>
    %cst_13 = arith.constant 0.000000e+00 : f32
    %13 = vector.broadcast %cst_13 : f32 to vector<32x256xf32>
    %14 = arith.maximumf %12, %13 : vector<32x256xf32>
    %c1 = arith.constant 1 : index
    %c0_14 = arith.constant 0 : index
    %c0_15 = arith.constant 0 : index
    %15 = vector.load %arg2[%c1, %c0_14, %c0_15] : memref<2x32x32xf32, #tpu.memory_space<vmem>>, vector<1x32x32xf32>
    %16 = vector.shape_cast %15 : vector<1x32x32xf32> to vector<32x32xf32>
    %cst_16 = arith.constant dense<0.000000e+00> : vector<32x256xf32>
    %17 = tpu.matmul %16, %14, %cst_16 {dimension_numbers = #tpu.dot_dimension_numbers<[1], [0], [0], [1], [0, 0, 1, 1], [], []>} : vector<32x32xf32>, vector<32x256xf32>, vector<32x256xf32> -> vector<32x256xf32>
    %c1_17 = arith.constant 1 : index
    %c0_18 = arith.constant 0 : index
    %c0_19 = arith.constant 0 : index
    %18 = vector.load %arg5[%c1_17, %c0_18, %c0_19] : memref<2x32x256xf32, #tpu.memory_space<vmem>>, vector<1x32x256xf32>
    %19 = vector.shape_cast %18 : vector<1x32x256xf32> to vector<32x256xf32>
    %20 = arith.addf %17, %19 : vector<32x256xf32>
    %cst_20 = arith.constant 0.000000e+00 : f32
    %21 = vector.broadcast %cst_20 : f32 to vector<32x256xf32>
    %22 = arith.maximumf %20, %21 : vector<32x256xf32>
    %c0_21 = arith.constant 0 : index
    %c0_22 = arith.constant 0 : index
    %23 = vector.load %arg3[%c0_21, %c0_22] : memref<8x32xf32, #tpu.memory_space<vmem>>, vector<8x32xf32>
    %cst_23 = arith.constant dense<0.000000e+00> : vector<8x256xf32>
    %24 = tpu.matmul %23, %22, %cst_23 {dimension_numbers = #tpu.dot_dimension_numbers<[1], [0], [0], [1], [0, 0, 1, 1], [], []>} : vector<8x32xf32>, vector<32x256xf32>, vector<8x256xf32> -> vector<8x256xf32>
    %c0_24 = arith.constant 0 : index
    %c0_25 = arith.constant 0 : index
    %25 = vector.load %arg6[%c0_24, %c0_25] : memref<8x256xf32, #tpu.memory_space<vmem>>, vector<8x256xf32>
    %26 = arith.addf %24, %25 : vector<8x256xf32>
    %c0_26 = arith.constant 0 : index
    %c0_27 = arith.constant 0 : index
    %27 = vector.load %arg7[%c0_26, %c0_27] : memref<8x256xf32, #tpu.memory_space<vmem>>, vector<8x256xf32>
    tpu.vector_store %arg7[%c0_26, %c0_27], %26 {strides = array<i32>} : memref<8x256xf32, #tpu.memory_space<vmem>>, vector<8x256xf32>,
    return
  }
}

</mosaic_0001>

<llo_original>
// kernel: weights_field_forward.1
$region0: #{weights_field_forward.1}
  #allocation0 [shape = 'u32[]', space=smem, size = 0x4, offset = 0x4, fixed_abs, tag = 'smem constant byte address 0x4 - core index']
  #allocation1 [shape = 'u32[144,128]{1,0:T(1,128)}', space=vmem, size = 0x12000, scoped, tag = 'internal scratch']
  %s0 = inlined_call_operand.vmem [shape: f32[8,256], index: 0, kind: input, shape index: {}]
  %s1 = inlined_call_operand.vmem [shape: f32[32,8], index: 1, kind: input, shape index: {}]
  %s2 = inlined_call_operand.vmem [shape: f32[2,32,32], index: 2, kind: input, shape index: {}]
  %s3 = inlined_call_operand.vmem [shape: f32[8,32], index: 3, kind: input, shape index: {}]
  %s4 = inlined_call_operand.vmem [shape: f32[32,256], index: 4, kind: input, shape index: {}]
  %s5 = inlined_call_operand.vmem [shape: f32[2,32,256], index: 5, kind: input, shape index: {}]
  %s6 = inlined_call_operand.vmem [shape: f32[8,256], index: 6, kind: input, shape index: {}]
  %s7 = inlined_call_operand.vmem [shape: f32[8,256], index: 7, kind: output, shape index: {}]
  %s8 = sld [smem:[#allocation0]]
  $region38: #{weights_field_forward.1} parent=0
    _
  %s10 = ssub.s32 1, %s8
  %s11 = scalar_select 0, %s10, %s8
  // Predicated region
  $region2: #{weights_field_forward.1} parent=0 // pred_check
    _
  $region3: #{weights_field_forward.1} parent=0 // pred_check_branch
    %13 = sbr.rel (0) target = $region5
  $region4: #{weights_field_forward.1} parent=0 // pred_region
    _
  $region5: #{weights_field_forward.1} parent=0 // pred_fallthru
    _
  // Predicated region
  $region6: #{weights_field_forward.1} parent=0 // pred_check
    _
  $region7: #{weights_field_forward.1} parent=0 // pred_check_branch
    %15 = sbr.rel (0) target = $region9
  $region8: #{weights_field_forward.1} parent=0 // pred_region
    _
  $region9: #{weights_field_forward.1} parent=0 // pred_fallthru
    _
  // Predicated region
  $region10: #{weights_field_forward.1} parent=0 // pred_check
    _
  $region11: #{weights_field_forward.1} parent=0 // pred_check_branch
    %17 = sbr.rel (0) target = $region13
  $region12: #{weights_field_forward.1} parent=0 // pred_region
    _
  $region13: #{weights_field_forward.1} parent=0 // pred_fallthru
    _
  // Predicated region
  $region14: #{weights_field_forward.1} parent=0 // pred_check
    _
  $region15: #{weights_field_forward.1} parent=0 // pred_check_branch
    %19 = sbr.rel (0) target = $region17
  $region16: #{weights_field_forward.1} parent=0 // pred_region
    _
  $region17: #{weights_field_forward.1} parent=0 // pred_fallthru
    _
  // Predicated region
  $region18: #{weights_field_forward.1} parent=0 // pred_check
    _
  $region19: #{weights_field_forward.1} parent=0 // pred_check_branch
    %21 = sbr.rel (0) target = $region21
  $region20: #{weights_field_forward.1} parent=0 // pred_region
    _
  $region21: #{weights_field_forward.1} parent=0 // pred_fallthru
    _
  // Predicated region
  $region22: #{weights_field_forward.1} parent=0 // pred_check
    _
  $region23: #{weights_field_forward.1} parent=0 // pred_check_branch
    %23 = sbr.rel (0) target = $region25
  $region24: #{weights_field_forward.1} parent=0 // pred_region
    _
  $region25: #{weights_field_forward.1} parent=0 // pred_fallthru
    _
  // Predicated region
  $region26: #{weights_field_forward.1} parent=0 // pred_check
    _
  $region27: #{weights_field_forward.1} parent=0 // pred_check_branch
    %25 = sbr.rel (0) target = $region29
  $region28: #{weights_field_forward.1} parent=0 // pred_region
    _
  $region29: #{weights_field_forward.1} parent=0 // pred_fallthru
    _
  %v26 = vld [vmem:[%s1] sm:$0xff]
  %v27 = vld [vmem:[%s1 + $0x8] sm:$0xff]
  %v28 = vld [vmem:[%s1 + $0x10] sm:$0xff]
  %v29 = vld [vmem:[%s1 + $0x18] sm:$0xff]
  %v30 = vld [vmem:[%s0] sm:$0xff]
  %v31 = vld [vmem:[%s0 + $0x8] sm:$0xff]
  %v32 = vld [vmem:[%s4] sm:$0xff]
  %v33 = vld [vmem:[%s4 + $0x8] sm:$0xff]
  %v34 = vld [vmem:[%s4 + $0x10] sm:$0xff]
  %v35 = vld [vmem:[%s4 + $0x18] sm:$0xff]
  %v36 = vld [vmem:[%s4 + $0x20] sm:$0xff]
  %v37 = vld [vmem:[%s4 + $0x28] sm:$0xff]
  %v38 = vld [vmem:[%s4 + $0x30] sm:$0xff]
  %v39 = vld [vmem:[%s4 + $0x38] sm:$0xff]
  %vm40 = vcmask 64512
  %v42 = vsel %vm40, %v26, 0
  %v45 = vsel %vm40, %v27, 0
  %v48 = vsel %vm40, %v28, 0
  %v51 = vsel %vm40, %v29, 0
  %53 = vmatprep.subr.mxu0 0.0
  %54 = vmatpush1.msra.mxu0 0.0
  %55 = vmatprep.subr.mxu0 0.0
  %56 = vmatpush1.msra.mxu0 0.0
  %57 = vmatprep.subr.mxu0 0.0
  %58 = vmatpush1.msra.mxu0 0.0
  %59 = vmatprep.subr.mxu0 0.0
  %60 = vmatpush1.msra.mxu0 0.0
  %61 = vmatprep.subr.mxu0 0.0
  %62 = vmatpush1.msra.mxu0 0.0
  %63 = vmatprep.subr.mxu0 0.0
  %64 = vmatpush1.msra.mxu0 0.0
  %65 = vmatprep.subr.mxu0 0.0
  %66 = vmatpush1.msra.mxu0 0.0
  %67 = vmatprep.subr.mxu0 0.0
  %68 = vmatpush1.msra.mxu0 0.0
  %69 = vmatprep.subr.mxu0 0.0
  %70 = vmatpush1.msra.mxu0 0.0
  %71 = vmatprep.subr.mxu0 0.0
  %72 = vmatpush1.msra.mxu0 0.0
  %73 = vmatprep.subr.mxu0 0.0
  %74 = vmatpush1.msra.mxu0 0.0
  %75 = vmatprep.subr.mxu0 0.0
  %76 = vmatpush1.msra.mxu0 0.0
  %77 = vmatprep.subr.mxu0 0.0
  %78 = vmatpush1.msra.mxu0 0.0
  %79 = vmatprep.subr.mxu0 0.0
  %80 = vmatpush1.msra.mxu0 0.0
  %81 = vmatprep.subr.mxu0 0.0
  %82 = vmatpush1.msra.mxu0 0.0
  %83 = vmatprep.subr.mxu0 %v31
  %84 = vmatpush1.msra.mxu0 %v30
  %85 = vmatprep.subr.mxu0 0.0
  %86 = vmatpush2.msra.mxu0 0.0
  %87 = vmatprep.subr.mxu0 0.0
  %88 = vmatpush2.msra.mxu0 0.0
  %89 = vmatprep.subr.mxu0 0.0
  %90 = vmatpush2.msra.mxu0 0.0
  %91 = vmatprep.subr.mxu0 0.0
  %92 = vmatpush2.msra.mxu0 0.0
  %93 = vmatprep.subr.mxu0 0.0
  %94 = vmatpush2.msra.mxu0 0.0
  %95 = vmatprep.subr.mxu0 0.0
  %96 = vmatpush2.msra.mxu0 0.0
  %97 = vmatprep.subr.mxu0 0.0
  %98 = vmatpush2.msra.mxu0 0.0
  %99 = vmatprep.subr.mxu0 0.0
  %100 = vmatpush2.msra.mxu0 0.0
  %101 = vmatprep.subr.mxu0 0.0
  %102 = vmatpush2.msra.mxu0 0.0
  %103 = vmatprep.subr.mxu0 0.0
  %104 = vmatpush2.msra.mxu0 0.0
  %105 = vmatprep.subr.mxu0 0.0
  %106 = vmatpush2.msra.mxu0 0.0
  %107 = vmatprep.subr.mxu0 0.0
  %108 = vmatpush2.msra.mxu0 0.0
  %109 = vmatprep.subr.mxu0 0.0
  %110 = vmatpush2.msra.mxu0 0.0
  %111 = vmatprep.subr.mxu0 0.0
  %112 = vmatpush2.msra.mxu0 0.0
  %113 = vmatprep.subr.mxu0 0.0
  %114 = vmatpush2.msra.mxu0 0.0
  %115 = vmatprep.subr.mxu0 0.0
  %116 = vmatpush2.msra.mxu0 0.0
  %117 = vmatprep.mubr.f32.mxu0 0.0
  %118 = vmatmul.mubr.f32.gmra.mxu0 %v42
  %v119 = vpop.f32.mrf.mxu0
  %v120 = vadd.f32 %v32, %v119
  %v121 = vpop.f32.mrf.mxu0
  %v122 = vadd.f32 %v33, %v121
  %123 = vmatprep.mubr.f32.mxu0 0.0
  %124 = vmatmul.mubr.f32.gmra.mxu0 %v45
  %v125 = vpop.f32.mrf.mxu0
  %v126 = vadd.f32 %v34, %v125
  %v127 = vpop.f32.mrf.mxu0
  %v128 = vadd.f32 %v35, %v127
  %129 = vmatprep.mubr.f32.mxu0 0.0
  %130 = vmatmul.mubr.f32.gmra.mxu0 %v48
  %v131 = vpop.f32.mrf.mxu0
  %v132 = vadd.f32 %v36, %v131
  %v133 = vpop.f32.mrf.mxu0
  %v134 = vadd.f32 %v37, %v133
  %135 = vmatprep.mubr.f32.mxu0 0.0
  %136 = vmatmul.mubr.f32.gmra.mxu0 %v51
  %v137 = vpop.f32.mrf.mxu0
  %v138 = vadd.f32 %v38, %v137
  %v139 = vpop.f32.mrf.mxu0
  %v140 = vadd.f32 %v39, %v139
  %141 = vdwg.mxu0
  %v142 = vmax.f32 %v120, 0.0
  %v143 = vmax.f32 %v122, 0.0
  %v144 = vmax.f32 %v126, 0.0
  %v145 = vmax.f32 %v128, 0.0
  %v146 = vmax.f32 %v132, 0.0
  %v147 = vmax.f32 %v134, 0.0
  %v148 = vmax.f32 %v138, 0.0
  %v149 = vmax.f32 %v140, 0.0
  %v150 = vld [vmem:[%s2] sm:$0xff]
  %v151 = vld [vmem:[%s2 + $0x8] sm:$0xff]
  %v152 = vld [vmem:[%s2 + $0x10] sm:$0xff]
  %v153 = vld [vmem:[%s2 + $0x18] sm:$0xff]
  %v154 = vld [vmem:[%s5] sm:$0xff]
  %v155 = vld [vmem:[%s5 + $0x8] sm:$0xff]
  %v156 = vld [vmem:[%s5 + $0x10] sm:$0xff]
  %v157 = vld [vmem:[%s5 + $0x18] sm:$0xff]
  %v158 = vld [vmem:[%s5 + $0x20] sm:$0xff]
  %v159 = vld [vmem:[%s5 + $0x28] sm:$0xff]
  %v160 = vld [vmem:[%s5 + $0x30] sm:$0xff]
  %v161 = vld [vmem:[%s5 + $0x38] sm:$0xff]
  %vm162 = vcmask 261120
  %v164 = vsel %vm162, %v150, 0
  %v167 = vsel %vm162, %v151, 0
  %v170 = vsel %vm162, %v152, 0
  %v173 = vsel %vm162, %v153, 0
  %175 = vmatprep.subr.mxu0 0.0
  %176 = vmatpush1.msra.mxu0 0.0
  %177 = vmatprep.subr.mxu0 0.0
  %178 = vmatpush1.msra.mxu0 0.0
  %179 = vmatprep.subr.mxu0 0.0
  %180 = vmatpush1.msra.mxu0 0.0
  %181 = vmatprep.subr.mxu0 0.0
  %182 = vmatpush1.msra.mxu0 0.0
  %183 = vmatprep.subr.mxu0 0.0
  %184 = vmatpush1.msra.mxu0 0.0
  %185 = vmatprep.subr.mxu0 0.0
  %186 = vmatpush1.msra.mxu0 0.0
  %187 = vmatprep.subr.mxu0 0.0
  %188 = vmatpush1.msra.mxu0 0.0
  %189 = vmatprep.subr.mxu0 0.0
  %190 = vmatpush1.msra.mxu0 0.0
  %191 = vmatprep.subr.mxu0 0.0
  %192 = vmatpush1.msra.mxu0 0.0
  %193 = vmatprep.subr.mxu0 0.0
  %194 = vmatpush1.msra.mxu0 0.0
  %195 = vmatprep.subr.mxu0 0.0
  %196 = vmatpush1.msra.mxu0 0.0
  %197 = vmatprep.subr.mxu0 0.0
  %198 = vmatpush1.msra.mxu0 0.0
  %199 = vmatprep.subr.mxu0 %v149
  %200 = vmatpush1.msra.mxu0 %v148
  %201 = vmatprep.subr.mxu0 %v147
  %202 = vmatpush1.msra.mxu0 %v146
  %203 = vmatprep.subr.mxu0 %v145
  %204 = vmatpush1.msra.mxu0 %v144
  %205 = vmatprep.subr.mxu0 %v143
  %206 = vmatpush1.msra.mxu0 %v142
  %207 = vmatprep.subr.mxu0 0.0
  %208 = vmatpush2.msra.mxu0 0.0
  %209 = vmatprep.subr.mxu0 0.0
  %210 = vmatpush2.msra.mxu0 0.0
  %211 = vmatprep.subr.mxu0 0.0
  %212 = vmatpush2.msra.mxu0 0.0
  %213 = vmatprep.subr.mxu0 0.0
  %214 = vmatpush2.msra.mxu0 0.0
  %215 = vmatprep.subr.mxu0 0.0
  %216 = vmatpush2.msra.mxu0 0.0
  %217 = vmatprep.subr.mxu0 0.0
  %218 = vmatpush2.msra.mxu0 0.0
  %219 = vmatprep.subr.mxu0 0.0
  %220 = vmatpush2.msra.mxu0 0.0
  %221 = vmatprep.subr.mxu0 0.0
  %222 = vmatpush2.msra.mxu0 0.0
  %223 = vmatprep.subr.mxu0 0.0
  %224 = vmatpush2.msra.mxu0 0.0
  %225 = vmatprep.subr.mxu0 0.0
  %226 = vmatpush2.msra.mxu0 0.0
  %227 = vmatprep.subr.mxu0 0.0
  %228 = vmatpush2.msra.mxu0 0.0
  %229 = vmatprep.subr.mxu0 0.0
  %230 = vmatpush2.msra.mxu0 0.0
  %231 = vmatprep.subr.mxu0 0.0
  %232 = vmatpush2.msra.mxu0 0.0
  %233 = vmatprep.subr.mxu0 0.0
  %234 = vmatpush2.msra.mxu0 0.0
  %235 = vmatprep.subr.mxu0 0.0
  %236 = vmatpush2.msra.mxu0 0.0
  %237 = vmatprep.subr.mxu0 0.0
  %238 = vmatpush2.msra.mxu0 0.0
  %239 = vmatprep.mubr.f32.mxu0 0.0
  %240 = vmatmul.mubr.f32.gmra.mxu0 %v164
  %v241 = vpop.f32.mrf.mxu0
  %v242 = vadd.f32 %v154, %v241
  %v243 = vpop.f32.mrf.mxu0
  %v244 = vadd.f32 %v155, %v243
  %245 = vmatprep.mubr.f32.mxu0 0.0
  %246 = vmatmul.mubr.f32.gmra.mxu0 %v167
  %v247 = vpop.f32.mrf.mxu0
  %v248 = vadd.f32 %v156, %v247
  %v249 = vpop.f32.mrf.mxu0
  %v250 = vadd.f32 %v157, %v249
  %251 = vmatprep.mubr.f32.mxu0 0.0
  %252 = vmatmul.mubr.f32.gmra.mxu0 %v170
  %v253 = vpop.f32.mrf.mxu0
  %v254 = vadd.f32 %v158, %v253
  %v255 = vpop.f32.mrf.mxu0
  %v256 = vadd.f32 %v159, %v255
  %257 = vmatprep.mubr.f32.mxu0 0.0
  %258 = vmatmul.mubr.f32.gmra.mxu0 %v173
  %v259 = vpop.f32.mrf.mxu0
  %v260 = vadd.f32 %v160, %v259
  %v261 = vpop.f32.mrf.mxu0
  %v262 = vadd.f32 %v161, %v261
  %263 = vdwg.mxu0
  %v264 = vmax.f32 %v242, 0.0
  %v265 = vmax.f32 %v244, 0.0
  %v266 = vmax.f32 %v248, 0.0
  %v267 = vmax.f32 %v250, 0.0
  %v268 = vmax.f32 %v254, 0.0
  %v269 = vmax.f32 %v256, 0.0
  %v270 = vmax.f32 %v260, 0.0
  %v271 = vmax.f32 %v262, 0.0
  %s272 = scalar_lea.vmem %s2, 32
  %v273 = vld [vmem:[%s272] sm:$0xff]
  %v274 = vld [vmem:[%s272 + $0x8] sm:$0xff]
  %v275 = vld [vmem:[%s272 + $0x10] sm:$0xff]
  %v276 = vld [vmem:[%s272 + $0x18] sm:$0xff]
  %s277 = scalar_lea.vmem %s5, 64
  %v278 = vld [vmem:[%s277] sm:$0xff]
  %v279 = vld [vmem:[%s277 + $0x8] sm:$0xff]
  %v280 = vld [vmem:[%s277 + $0x10] sm:$0xff]
  %v281 = vld [vmem:[%s277 + $0x18] sm:$0xff]
  %v282 = vld [vmem:[%s277 + $0x20] sm:$0xff]
  %v283 = vld [vmem:[%s277 + $0x28] sm:$0xff]
  %v284 = vld [vmem:[%s277 + $0x30] sm:$0xff]
  %v285 = vld [vmem:[%s277 + $0x38] sm:$0xff]
  %v287 = vsel %vm162, %v273, 0
  %v290 = vsel %vm162, %v274, 0
  %v293 = vsel %vm162, %v275, 0
  %v296 = vsel %vm162, %v276, 0
  %298 = vmatprep.subr.mxu0 0.0
  %299 = vmatpush1.msra.mxu0 0.0
  %300 = vmatprep.subr.mxu0 0.0
  %301 = vmatpush1.msra.mxu0 0.0
  %302 = vmatprep.subr.mxu0 0.0
  %303 = vmatpush1.msra.mxu0 0.0
  %304 = vmatprep.subr.mxu0 0.0
  %305 = vmatpush1.msra.mxu0 0.0
  %306 = vmatprep.subr.mxu0 0.0
  %307 = vmatpush1.msra.mxu0 0.0
  %308 = vmatprep.subr.mxu0 0.0
  %309 = vmatpush1.msra.mxu0 0.0
  %310 = vmatprep.subr.mxu0 0.0
  %311 = vmatpush1.msra.mxu0 0.0
  %312 = vmatprep.subr.mxu0 0.0
  %313 = vmatpush1.msra.mxu0 0.0
  %314 = vmatprep.subr.mxu0 0.0
  %315 = vmatpush1.msra.mxu0 0.0
  %316 = vmatprep.subr.mxu0 0.0
  %317 = vmatpush1.msra.mxu0 0.0
  %318 = vmatprep.subr.mxu0 0.0
  %319 = vmatpush1.msra.mxu0 0.0
  %320 = vmatprep.subr.mxu0 0.0
  %321 = vmatpush1.msra.mxu0 0.0
  %322 = vmatprep.subr.mxu0 %v271
  %323 = vmatpush1.msra.mxu0 %v270
  %324 = vmatprep.subr.mxu0 %v269
  %325 = vmatpush1.msra.mxu0 %v268
  %326 = vmatprep.subr.mxu0 %v267
  %327 = vmatpush1.msra.mxu0 %v266
  %328 = vmatprep.subr.mxu0 %v265
  %329 = vmatpush1.msra.mxu0 %v264
  %330 = vmatprep.subr.mxu0 0.0
  %331 = vmatpush2.msra.mxu0 0.0
  %332 = vmatprep.subr.mxu0 0.0
  %333 = vmatpush2.msra.mxu0 0.0
  %334 = vmatprep.subr.mxu0 0.0
  %335 = vmatpush2.msra.mxu0 0.0
  %336 = vmatprep.subr.mxu0 0.0
  %337 = vmatpush2.msra.mxu0 0.0
  %338 = vmatprep.subr.mxu0 0.0
  %339 = vmatpush2.msra.mxu0 0.0
  %340 = vmatprep.subr.mxu0 0.0
  %341 = vmatpush2.msra.mxu0 0.0
  %342 = vmatprep.subr.mxu0 0.0
  %343 = vmatpush2.msra.mxu0 0.0
  %344 = vmatprep.subr.mxu0 0.0
  %345 = vmatpush2.msra.mxu0 0.0
  %346 = vmatprep.subr.mxu0 0.0
  %347 = vmatpush2.msra.mxu0 0.0
  %348 = vmatprep.subr.mxu0 0.0
  %349 = vmatpush2.msra.mxu0 0.0
  %350 = vmatprep.subr.mxu0 0.0
  %351 = vmatpush2.msra.mxu0 0.0
  %352 = vmatprep.subr.mxu0 0.0
  %353 = vmatpush2.msra.mxu0 0.0
  %354 = vmatprep.subr.mxu0 0.0
  %355 = vmatpush2.msra.mxu0 0.0
  %356 = vmatprep.subr.mxu0 0.0
  %357 = vmatpush2.msra.mxu0 0.0
  %358 = vmatprep.subr.mxu0 0.0
  %359 = vmatpush2.msra.mxu0 0.0
  %360 = vmatprep.subr.mxu0 0.0
  %361 = vmatpush2.msra.mxu0 0.0
  %362 = vmatprep.mubr.f32.mxu0 0.0
  %363 = vmatmul.mubr.f32.gmra.mxu0 %v287
  %v364 = vpop.f32.mrf.mxu0
  %v365 = vadd.f32 %v278, %v364
  %v366 = vpop.f32.mrf.mxu0
  %v367 = vadd.f32 %v279, %v366
  %368 = vmatprep.mubr.f32.mxu0 0.0
  %369 = vmatmul.mubr.f32.gmra.mxu0 %v290
  %v370 = vpop.f32.mrf.mxu0
  %v371 = vadd.f32 %v280, %v370
  %v372 = vpop.f32.mrf.mxu0
  %v373 = vadd.f32 %v281, %v372
  %374 = vmatprep.mubr.f32.mxu0 0.0
  %375 = vmatmul.mubr.f32.gmra.mxu0 %v293
  %v376 = vpop.f32.mrf.mxu0
  %v377 = vadd.f32 %v282, %v376
  %v378 = vpop.f32.mrf.mxu0
  %v379 = vadd.f32 %v283, %v378
  %380 = vmatprep.mubr.f32.mxu0 0.0
  %381 = vmatmul.mubr.f32.gmra.mxu0 %v296
  %v382 = vpop.f32.mrf.mxu0
  %v383 = vadd.f32 %v284, %v382
  %v384 = vpop.f32.mrf.mxu0
  %v385 = vadd.f32 %v285, %v384
  %386 = vdwg.mxu0
  %v387 = vmax.f32 %v365, 0.0
  %v388 = vmax.f32 %v367, 0.0
  %v389 = vmax.f32 %v371, 0.0
  %v390 = vmax.f32 %v373, 0.0
  %v391 = vmax.f32 %v377, 0.0
  %v392 = vmax.f32 %v379, 0.0
  %v393 = vmax.f32 %v383, 0.0
  %v394 = vmax.f32 %v385, 0.0
  %v395 = vld [vmem:[%s3] sm:$0xff]
  %v396 = vld [vmem:[%s6] sm:$0xff]
  %v397 = vld [vmem:[%s6 + $0x8] sm:$0xff]
  %v399 = vsel %vm162, %v395, 0
  %401 = vmatprep.subr.mxu0 0.0
  %402 = vmatpush1.msra.mxu0 0.0
  %403 = vmatprep.subr.mxu0 0.0
  %404 = vmatpush1.msra.mxu0 0.0
  %405 = vmatprep.subr.mxu0 0.0
  %406 = vmatpush1.msra.mxu0 0.0
  %407 = vmatprep.subr.mxu0 0.0
  %408 = vmatpush1.msra.mxu0 0.0
  %409 = vmatprep.subr.mxu0 0.0
  %410 = vmatpush1.msra.mxu0 0.0
  %411 = vmatprep.subr.mxu0 0.0
  %412 = vmatpush1.msra.mxu0 0.0
  %413 = vmatprep.subr.mxu0 0.0
  %414 = vmatpush1.msra.mxu0 0.0
  %415 = vmatprep.subr.mxu0 0.0
  %416 = vmatpush1.msra.mxu0 0.0
  %417 = vmatprep.subr.mxu0 0.0
  %418 = vmatpush1.msra.mxu0 0.0
  %419 = vmatprep.subr.mxu0 0.0
  %420 = vmatpush1.msra.mxu0 0.0
  %421 = vmatprep.subr.mxu0 0.0
  %422 = vmatpush1.msra.mxu0 0.0
  %423 = vmatprep.subr.mxu0 0.0
  %424 = vmatpush1.msra.mxu0 0.0
  %425 = vmatprep.subr.mxu0 %v394
  %426 = vmatpush1.msra.mxu0 %v393
  %427 = vmatprep.subr.mxu0 %v392
  %428 = vmatpush1.msra.mxu0 %v391
  %429 = vmatprep.subr.mxu0 %v390
  %430 = vmatpush1.msra.mxu0 %v389
  %431 = vmatprep.subr.mxu0 %v388
  %432 = vmatpush1.msra.mxu0 %v387
  %433 = vmatprep.subr.mxu0 0.0
  %434 = vmatpush2.msra.mxu0 0.0
  %435 = vmatprep.subr.mxu0 0.0
  %436 = vmatpush2.msra.mxu0 0.0
  %437 = vmatprep.subr.mxu0 0.0
  %438 = vmatpush2.msra.mxu0 0.0
  %439 = vmatprep.subr.mxu0 0.0
  %440 = vmatpush2.msra.mxu0 0.0
  %441 = vmatprep.subr.mxu0 0.0
  %442 = vmatpush2.msra.mxu0 0.0
  %443 = vmatprep.subr.mxu0 0.0
  %444 = vmatpush2.msra.mxu0 0.0
  %445 = vmatprep.subr.mxu0 0.0
  %446 = vmatpush2.msra.mxu0 0.0
  %447 = vmatprep.subr.mxu0 0.0
  %448 = vmatpush2.msra.mxu0 0.0
  %449 = vmatprep.subr.mxu0 0.0
  %450 = vmatpush2.msra.mxu0 0.0
  %451 = vmatprep.subr.mxu0 0.0
  %452 = vmatpush2.msra.mxu0 0.0
  %453 = vmatprep.subr.mxu0 0.0
  %454 = vmatpush2.msra.mxu0 0.0
  %455 = vmatprep.subr.mxu0 0.0
  %456 = vmatpush2.msra.mxu0 0.0
  %457 = vmatprep.subr.mxu0 0.0
  %458 = vmatpush2.msra.mxu0 0.0
  %459 = vmatprep.subr.mxu0 0.0
  %460 = vmatpush2.msra.mxu0 0.0
  %461 = vmatprep.subr.mxu0 0.0
  %462 = vmatpush2.msra.mxu0 0.0
  %463 = vmatprep.subr.mxu0 0.0
  %464 = vmatpush2.msra.mxu0 0.0
  %465 = vmatprep.mubr.f32.mxu0 0.0
  %466 = vmatmul.mubr.f32.gmra.mxu0 %v399
  %v467 = vpop.f32.mrf.mxu0
  %v468 = vadd.f32 %v396, %v467
  %v469 = vpop.f32.mrf.mxu0
  %v470 = vadd.f32 %v397, %v469
  %471 = vdwg.mxu0
  %472 = vst [vmem:[%s7] sm:$0xff] %v468
  %473 = vst [vmem:[%s7 + $0x8] sm:$0xff] %v470
  // Predicated region
  $region30: #{weights_field_forward.1} parent=0 // pred_check
    _
  $region31: #{weights_field_forward.1} parent=0 // pred_check_branch
    %475 = sbr.rel (0) target = $region33
  $region32: #{weights_field_forward.1} parent=0 // pred_region
    _
  $region33: #{weights_field_forward.1} parent=0 // pred_fallthru
    _
  // Predicated region
  $region34: #{weights_field_forward.1} parent=0 // pred_check
    _
  $region35: #{weights_field_forward.1} parent=0 // pred_check_branch
    %477 = sbr.rel (0) target = $region37
  $region36: #{weights_field_forward.1} parent=0 // pred_region
    _
  $region37: #{weights_field_forward.1} parent=0 // pred_fallthru
    _

</llo_original>
